<compile_context>
chip_gen: v7x
topology: tpu7x:2x2x1
jax: 0.10.0
libtpu: 0.0.40
codegen_flags: <defaults>
</compile_context>

<pallas_src>
import jax
import jax.numpy as jnp
from jax.experimental import pallas as pl
from jax.experimental.pallas import tpu as pltpu


def embedder_kernel(idx_ref, table_ref, pos_ref, out_ref):
    """Embedding row gather + positional-encoding add, [8,128]-group granularity.

    idx_ref:   SMEM [B_pad * C_pad]      int32 (scalar-prefetched token indices)
    table_ref: VMEM [V, D_pad]           f32   (resident embedding table, row 0 == 0)
    pos_ref:   VMEM [C_pad, D_pad]       f32   (positional encoding, NOT batch-tiled)
    out_ref:   VMEM [TB, C_pad, D_pad]   f32   (one batch-block of outputs)
    """
    TB, C_pad, _ = out_ref.shape
    pos = pos_ref[...]                                   # [C_pad, D_pad], hoisted
    b0 = pl.program_id(0) * TB

    # TODO(synk): for large per-block row counts (512+), switch this static
    # unroll to lax.fori_loop(..., unroll=True) to bound live ranges.
    for b in range(TB):                                   # static, small (TB == 8)
        base = (b0 + b) * C_pad
        # C_pad dynamic single-row gathers from the table (scalar index from SMEM),
        # fused into one [C_pad, D_pad] vreg group via concatenate (XLU, free slot).
        rows = [table_ref[pl.ds(idx_ref[base + c], 1), :] for c in range(C_pad)]
        gathered = jnp.concatenate(rows, axis=0)          # [C_pad, D_pad]
        # One full-vreg VPU add + one unmasked [8, 128] store per batch element.
        out_ref[b] = gathered + pos


def pos_model_embed(indices, table, pos_enc, *, batch_block=8):
    """Embedder forward: out[b, c, :] = table[indices[b, c], :] + pos_enc[c, :].

    Layout plumbing (index clamp, batch/context/lane padding, final slice) is
    done here; the kernel only sees aligned, lane-dense blocks.
    """
    B, C = indices.shape
    V, D = table.shape

    TB = batch_block
    C_pad = max(8, ((C + 7) // 8) * 8)                    # sublane-align context dim
    D_pad = ((D + 127) // 128) * 128                      # lane-align embed dim
    B_pad = ((B + TB - 1) // TB) * TB                     # batch multiple of block

    # Clamp indices (no bounds check inside the kernel) and pad with index 0,
    # which is the all-zero padding row.
    idx = jnp.clip(indices.astype(jnp.int32), 0, V - 1)
    idx = jnp.pad(idx, ((0, B_pad - B), (0, C_pad - C)))
    idx_flat = idx.reshape(B_pad * C_pad)                 # flat 1-D SMEM layout

    table_p = jnp.pad(table.astype(jnp.float32), ((0, 0), (0, D_pad - D)))
    pos_p = jnp.pad(pos_enc.astype(jnp.float32),
                    ((0, C_pad - C), (0, D_pad - D)))

    grid = (B_pad // TB,)

    cost = pl.CostEstimate(
        flops=B_pad * C_pad * D_pad,                      # one add per output elem
        transcendentals=0,
        bytes_accessed=(V * D_pad + C_pad * D_pad + B_pad * C_pad * D_pad) * 4
        + B_pad * C_pad * 4,
    )

    # TODO(synk): at toy sizes this call is dispatch-overhead bound; in a real
    # model this embed+pos-add should be fused into the consumer kernel, the
    # table/pos stored in bf16 on v6e/v7x, and TB raised (re-derived against
    # v7x's 64 MiB VMEM) so each block carries 512-1024 output rows.
    out = pl.pallas_call(
        embedder_kernel,
        out_shape=jax.ShapeDtypeStruct((B_pad, C_pad, D_pad), jnp.float32),
        grid_spec=pltpu.PrefetchScalarGridSpec(
            num_scalar_prefetch=1,                        # idx_flat -> SMEM
            grid=grid,
            in_specs=[
                # Resident (same block every step): embedding table.
                pl.BlockSpec((V, D_pad), lambda i, idx_r: (0, 0)),
                # Resident: positional encoding, passed once (not batch-tiled).
                pl.BlockSpec((C_pad, D_pad), lambda i, idx_r: (0, 0)),
            ],
            out_specs=pl.BlockSpec((TB, C_pad, D_pad), lambda i, idx_r: (i, 0, 0)),
        ),
        compiler_params=pltpu.CompilerParams(
            dimension_semantics=("parallel",),            # shard batch blocks on v7x
        ),
        cost_estimate=cost,
    )(idx_flat, table_p, pos_p)

    return out[:B, :C, :D]


def make_positional_encoding(context_len, embed_dim):
    """Standard sinusoidal positional encoding [context_len, embed_dim]."""
    pos = jnp.arange(context_len, dtype=jnp.float32)[:, None]          # [C, 1]
    i = jnp.arange(embed_dim // 2, dtype=jnp.float32)[None, :]         # [1, D/2]
    angle = pos / jnp.power(10000.0, (2.0 * i) / embed_dim)            # [C, D/2]
    pe = jnp.zeros((context_len, embed_dim), jnp.float32)
    pe = pe.at[:, 0::2].set(jnp.sin(angle))
    pe = pe.at[:, 1::2].set(jnp.cos(angle))
    return pe


# TODO(synk): PosModel.forward raises NotImplementedError upstream; only the
# Embedder sub-module (embedding lookup + positional encoding) has defined
# semantics, so that is what the kernel implements.

if __name__ == "__main__":
    key = jax.random.PRNGKey(0)

    # Small shapes consistent with khaiii: window=3 -> context of 7 chars,
    # embed_dim deliberately NOT a multiple of 128 to exercise lane padding.
    B = 2                # batch
    WINDOW = 3
    C = 2 * WINDOW + 1   # context length = 7
    V = 32               # vocab size (len(rsc.vocab_in))
    D = 64               # embed_dim

    k_idx, k_tab = jax.random.split(key)

    # Deterministic parameter init: nn.Embedding(V, D, padding_idx=0)
    table = jax.random.normal(k_tab, (V, D), dtype=jnp.float32)
    table = table.at[0].set(0.0)  # padding_idx=0 row is zero

    pos_enc = make_positional_encoding(C, D)

    # Deterministic example input: character indices [B, C], including padding idx 0.
    indices = jax.random.randint(k_idx, (B, C), minval=0, maxval=V, dtype=jnp.int32)

    out = pos_model_embed(indices, table, pos_enc)
    out = jax.block_until_ready(out)

    # Pure-JAX reference for correctness.
    ref = table[indices] + pos_enc[None, :, :]
    assert out.shape == (B, C, D)
    assert jnp.allclose(out, ref, atol=1e-5, rtol=1e-5), "mismatch vs reference"

    print("KERNEL_OK")
</pallas_src>

<mosaic_0001>
module attributes {stable_mosaic.version = 11 : i64} {
  func.func @embedder_kernel(%arg0: i32, %arg1: memref<64xi32, #tpu.memory_space<smem>>, %arg2: memref<32x128xf32, #tpu.memory_space<vmem>>, %arg3: memref<8x128xf32, #tpu.memory_space<vmem>>, %arg4: memref<8x8x128xf32, #tpu.memory_space<vmem>>) attributes {dimension_semantics = [#tpu.dimension_semantics<parallel>], iteration_bounds = array<i64: 1>, scalar_prefetch = 1 : i64, scratch_operands = 0 : i64, tpu.core_type = #tpu.core_type<tc>, window_params = [{pipeline_mode = #tpu.pipeline_mode<synchronous>, transform_indices = @transform_0, window_bounds = array<i64: 32, 128>}, {pipeline_mode = #tpu.pipeline_mode<synchronous>, transform_indices = @transform_1, window_bounds = array<i64: 8, 128>}, {transform_indices = @transform_2, window_bounds = array<i64: 8, 8, 128>}]} {
    %c0 = arith.constant 0 : index
    %c0_0 = arith.constant 0 : index
    %0 = vector.load %arg3[%c0, %c0_0] : memref<8x128xf32, #tpu.memory_space<vmem>>, vector<8x128xf32>
    %c8_i32 = arith.constant 8 : i32
    %1 = arith.muli %arg0, %c8_i32 : i32
    %c0_i32 = arith.constant 0 : i32
    %2 = arith.addi %1, %c0_i32 : i32
    %c8_i32_1 = arith.constant 8 : i32
    %3 = arith.muli %2, %c8_i32_1 : i32
    %c0_i32_2 = arith.constant 0 : i32
    %4 = arith.addi %3, %c0_i32_2 : i32
    %5 = arith.index_cast %4 : i32 to index
    %6 = memref.load %arg1[%5] : memref<64xi32, #tpu.memory_space<smem>>
    %7 = arith.index_cast %6 : i32 to index
    %c0_3 = arith.constant 0 : index
    %8 = vector.load %arg2[%7, %c0_3] : memref<32x128xf32, #tpu.memory_space<vmem>>, vector<1x128xf32>
    %c1_i32 = arith.constant 1 : i32
    %9 = arith.addi %3, %c1_i32 : i32
    %10 = arith.index_cast %9 : i32 to index
    %11 = memref.load %arg1[%10] : memref<64xi32, #tpu.memory_space<smem>>
    %12 = arith.index_cast %11 : i32 to index
    %c0_4 = arith.constant 0 : index
    %13 = vector.load %arg2[%12, %c0_4] : memref<32x128xf32, #tpu.memory_space<vmem>>, vector<1x128xf32>
    %c2_i32 = arith.constant 2 : i32
    %14 = arith.addi %3, %c2_i32 : i32
    %15 = arith.index_cast %14 : i32 to index
    %16 = memref.load %arg1[%15] : memref<64xi32, #tpu.memory_space<smem>>
    %17 = arith.index_cast %16 : i32 to index
    %c0_5 = arith.constant 0 : index
    %18 = vector.load %arg2[%17, %c0_5] : memref<32x128xf32, #tpu.memory_space<vmem>>, vector<1x128xf32>
    %c3_i32 = arith.constant 3 : i32
    %19 = arith.addi %3, %c3_i32 : i32
    %20 = arith.index_cast %19 : i32 to index
    %21 = memref.load %arg1[%20] : memref<64xi32, #tpu.memory_space<smem>>
    %22 = arith.index_cast %21 : i32 to index
    %c0_6 = arith.constant 0 : index
    %23 = vector.load %arg2[%22, %c0_6] : memref<32x128xf32, #tpu.memory_space<vmem>>, vector<1x128xf32>
    %c4_i32 = arith.constant 4 : i32
    %24 = arith.addi %3, %c4_i32 : i32
    %25 = arith.index_cast %24 : i32 to index
    %26 = memref.load %arg1[%25] : memref<64xi32, #tpu.memory_space<smem>>
    %27 = arith.index_cast %26 : i32 to index
    %c0_7 = arith.constant 0 : index
    %28 = vector.load %arg2[%27, %c0_7] : memref<32x128xf32, #tpu.memory_space<vmem>>, vector<1x128xf32>
    %c5_i32 = arith.constant 5 : i32
    %29 = arith.addi %3, %c5_i32 : i32
    %30 = arith.index_cast %29 : i32 to index
    %31 = memref.load %arg1[%30] : memref<64xi32, #tpu.memory_space<smem>>
    %32 = arith.index_cast %31 : i32 to index
    %c0_8 = arith.constant 0 : index
    %33 = vector.load %arg2[%32, %c0_8] : memref<32x128xf32, #tpu.memory_space<vmem>>, vector<1x128xf32>
    %c6_i32 = arith.constant 6 : i32
    %34 = arith.addi %3, %c6_i32 : i32
    %35 = arith.index_cast %34 : i32 to index
    %36 = memref.load %arg1[%35] : memref<64xi32, #tpu.memory_space<smem>>
    %37 = arith.index_cast %36 : i32 to index
    %c0_9 = arith.constant 0 : index
    %38 = vector.load %arg2[%37, %c0_9] : memref<32x128xf32, #tpu.memory_space<vmem>>, vector<1x128xf32>
    %c7_i32 = arith.constant 7 : i32
    %39 = arith.addi %3, %c7_i32 : i32
    %40 = arith.index_cast %39 : i32 to index
    %41 = memref.load %arg1[%40] : memref<64xi32, #tpu.memory_space<smem>>
    %42 = arith.index_cast %41 : i32 to index
    %c0_10 = arith.constant 0 : index
    %43 = vector.load %arg2[%42, %c0_10] : memref<32x128xf32, #tpu.memory_space<vmem>>, vector<1x128xf32>
    %44 = tpu.concatenate %8, %13, %18, %23, %28, %33, %38, %43 in 0 : vector<1x128xf32>, vector<1x128xf32>, vector<1x128xf32>, vector<1x128xf32>, vector<1x128xf32>, vector<1x128xf32>, vector<1x128xf32>, vector<1x128xf32> -> vector<8x128xf32>
    %45 = arith.addf %44, %0 : vector<8x128xf32>
    %c0_11 = arith.constant 0 : index
    %c0_12 = arith.constant 0 : index
    %c0_13 = arith.constant 0 : index
    %46 = vector.load %arg4[%c0_11, %c0_12, %c0_13] : memref<8x8x128xf32, #tpu.memory_space<vmem>>, vector<1x8x128xf32>
    %47 = vector.shape_cast %46 : vector<1x8x128xf32> to vector<8x128xf32>
    %48 = vector.shape_cast %45 : vector<8x128xf32> to vector<1x8x128xf32>
    tpu.vector_store %arg4[%c0_11, %c0_12, %c0_13], %48 {strides = array<i32>} : memref<8x8x128xf32, #tpu.memory_space<vmem>>, vector<1x8x128xf32>,
    %c1_i32_14 = arith.constant 1 : i32
    %49 = arith.addi %1, %c1_i32_14 : i32
    %c8_i32_15 = arith.constant 8 : i32
    %50 = arith.muli %49, %c8_i32_15 : i32
    %c0_i32_16 = arith.constant 0 : i32
    %51 = arith.addi %50, %c0_i32_16 : i32
    %52 = arith.index_cast %51 : i32 to index
    %53 = memref.load %arg1[%52] : memref<64xi32, #tpu.memory_space<smem>>
    %54 = arith.index_cast %53 : i32 to index
    %c0_17 = arith.constant 0 : index
    %55 = vector.load %arg2[%54, %c0_17] : memref<32x128xf32, #tpu.memory_space<vmem>>, vector<1x128xf32>
    %c1_i32_18 = arith.constant 1 : i32
    %56 = arith.addi %50, %c1_i32_18 : i32
    %57 = arith.index_cast %56 : i32 to index
    %58 = memref.load %arg1[%57] : memref<64xi32, #tpu.memory_space<smem>>
    %59 = arith.index_cast %58 : i32 to index
    %c0_19 = arith.constant 0 : index
    %60 = vector.load %arg2[%59, %c0_19] : memref<32x128xf32, #tpu.memory_space<vmem>>, vector<1x128xf32>
    %c2_i32_20 = arith.constant 2 : i32
    %61 = arith.addi %50, %c2_i32_20 : i32
    %62 = arith.index_cast %61 : i32 to index
    %63 = memref.load %arg1[%62] : memref<64xi32, #tpu.memory_space<smem>>
    %64 = arith.index_cast %63 : i32 to index
    %c0_21 = arith.constant 0 : index
    %65 = vector.load %arg2[%64, %c0_21] : memref<32x128xf32, #tpu.memory_space<vmem>>, vector<1x128xf32>
    %c3_i32_22 = arith.constant 3 : i32
    %66 = arith.addi %50, %c3_i32_22 : i32
    %67 = arith.index_cast %66 : i32 to index
    %68 = memref.load %arg1[%67] : memref<64xi32, #tpu.memory_space<smem>>
    %69 = arith.index_cast %68 : i32 to index
    %c0_23 = arith.constant 0 : index
    %70 = vector.load %arg2[%69, %c0_23] : memref<32x128xf32, #tpu.memory_space<vmem>>, vector<1x128xf32>
    %c4_i32_24 = arith.constant 4 : i32
    %71 = arith.addi %50, %c4_i32_24 : i32
    %72 = arith.index_cast %71 : i32 to index
    %73 = memref.load %arg1[%72] : memref<64xi32, #tpu.memory_space<smem>>
    %74 = arith.index_cast %73 : i32 to index
    %c0_25 = arith.constant 0 : index
    %75 = vector.load %arg2[%74, %c0_25] : memref<32x128xf32, #tpu.memory_space<vmem>>, vector<1x128xf32>
    %c5_i32_26 = arith.constant 5 : i32
    %76 = arith.addi %50, %c5_i32_26 : i32
    %77 = arith.index_cast %76 : i32 to index
    %78 = memref.load %arg1[%77] : memref<64xi32, #tpu.memory_space<smem>>
    %79 = arith.index_cast %78 : i32 to index
    %c0_27 = arith.constant 0 : index
    %80 = vector.load %arg2[%79, %c0_27] : memref<32x128xf32, #tpu.memory_space<vmem>>, vector<1x128xf32>
    %c6_i32_28 = arith.constant 6 : i32
    %81 = arith.addi %50, %c6_i32_28 : i32
    %82 = arith.index_cast %81 : i32 to index
    %83 = memref.load %arg1[%82] : memref<64xi32, #tpu.memory_space<smem>>
    %84 = arith.index_cast %83 : i32 to index
    %c0_29 = arith.constant 0 : index
    %85 = vector.load %arg2[%84, %c0_29] : memref<32x128xf32, #tpu.memory_space<vmem>>, vector<1x128xf32>
    %c7_i32_30 = arith.constant 7 : i32
    %86 = arith.addi %50, %c7_i32_30 : i32
    %87 = arith.index_cast %86 : i32 to index
    %88 = memref.load %arg1[%87] : memref<64xi32, #tpu.memory_space<smem>>
    %89 = arith.index_cast %88 : i32 to index
    %c0_31 = arith.constant 0 : index
    %90 = vector.load %arg2[%89, %c0_31] : memref<32x128xf32, #tpu.memory_space<vmem>>, vector<1x128xf32>
    %91 = tpu.concatenate %55, %60, %65, %70, %75, %80, %85, %90 in 0 : vector<1x128xf32>, vector<1x128xf32>, vector<1x128xf32>, vector<1x128xf32>, vector<1x128xf32>, vector<1x128xf32>, vector<1x128xf32>, vector<1x128xf32> -> vector<8x128xf32>
    %92 = arith.addf %91, %0 : vector<8x128xf32>
    %c1 = arith.constant 1 : index
    %c0_32 = arith.constant 0 : index
    %c0_33 = arith.constant 0 : index
    %93 = vector.load %arg4[%c1, %c0_32, %c0_33] : memref<8x8x128xf32, #tpu.memory_space<vmem>>, vector<1x8x128xf32>
    %94 = vector.shape_cast %93 : vector<1x8x128xf32> to vector<8x128xf32>
    %95 = vector.shape_cast %92 : vector<8x128xf32> to vector<1x8x128xf32>
    tpu.vector_store %arg4[%c1, %c0_32, %c0_33], %95 {strides = array<i32>} : memref<8x8x128xf32, #tpu.memory_space<vmem>>, vector<1x8x128xf32>,
    %c2_i32_34 = arith.constant 2 : i32
    %96 = arith.addi %1, %c2_i32_34 : i32
    %c8_i32_35 = arith.constant 8 : i32
    %97 = arith.muli %96, %c8_i32_35 : i32
    %c0_i32_36 = arith.constant 0 : i32
    %98 = arith.addi %97, %c0_i32_36 : i32
    %99 = arith.index_cast %98 : i32 to index
    %100 = memref.load %arg1[%99] : memref<64xi32, #tpu.memory_space<smem>>
    %101 = arith.index_cast %100 : i32 to index
    %c0_37 = arith.constant 0 : index
    %102 = vector.load %arg2[%101, %c0_37] : memref<32x128xf32, #tpu.memory_space<vmem>>, vector<1x128xf32>
    %c1_i32_38 = arith.constant 1 : i32
    %103 = arith.addi %97, %c1_i32_38 : i32
    %104 = arith.index_cast %103 : i32 to index
    %105 = memref.load %arg1[%104] : memref<64xi32, #tpu.memory_space<smem>>
    %106 = arith.index_cast %105 : i32 to index
    %c0_39 = arith.constant 0 : index
    %107 = vector.load %arg2[%106, %c0_39] : memref<32x128xf32, #tpu.memory_space<vmem>>, vector<1x128xf32>
    %c2_i32_40 = arith.constant 2 : i32
    %108 = arith.addi %97, %c2_i32_40 : i32
    %109 = arith.index_cast %108 : i32 to index
    %110 = memref.load %arg1[%109] : memref<64xi32, #tpu.memory_space<smem>>
    %111 = arith.index_cast %110 : i32 to index
    %c0_41 = arith.constant 0 : index
    %112 = vector.load %arg2[%111, %c0_41] : memref<32x128xf32, #tpu.memory_space<vmem>>, vector<1x128xf32>
    %c3_i32_42 = arith.constant 3 : i32
    %113 = arith.addi %97, %c3_i32_42 : i32
    %114 = arith.index_cast %113 : i32 to index
    %115 = memref.load %arg1[%114] : memref<64xi32, #tpu.memory_space<smem>>
    %116 = arith.index_cast %115 : i32 to index
    %c0_43 = arith.constant 0 : index
    %117 = vector.load %arg2[%116, %c0_43] : memref<32x128xf32, #tpu.memory_space<vmem>>, vector<1x128xf32>
    %c4_i32_44 = arith.constant 4 : i32
    %118 = arith.addi %97, %c4_i32_44 : i32
    %119 = arith.index_cast %118 : i32 to index
    %120 = memref.load %arg1[%119] : memref<64xi32, #tpu.memory_space<smem>>
    %121 = arith.index_cast %120 : i32 to index
    %c0_45 = arith.constant 0 : index
    %122 = vector.load %arg2[%121, %c0_45] : memref<32x128xf32, #tpu.memory_space<vmem>>, vector<1x128xf32>
    %c5_i32_46 = arith.constant 5 : i32
    %123 = arith.addi %97, %c5_i32_46 : i32
    %124 = arith.index_cast %123 : i32 to index
    %125 = memref.load %arg1[%124] : memref<64xi32, #tpu.memory_space<smem>>
    %126 = arith.index_cast %125 : i32 to index
    %c0_47 = arith.constant 0 : index
    %127 = vector.load %arg2[%126, %c0_47] : memref<32x128xf32, #tpu.memory_space<vmem>>, vector<1x128xf32>
    %c6_i32_48 = arith.constant 6 : i32
    %128 = arith.addi %97, %c6_i32_48 : i32
    %129 = arith.index_cast %128 : i32 to index
    %130 = memref.load %arg1[%129] : memref<64xi32, #tpu.memory_space<smem>>
    %131 = arith.index_cast %130 : i32 to index
    %c0_49 = arith.constant 0 : index
    %132 = vector.load %arg2[%131, %c0_49] : memref<32x128xf32, #tpu.memory_space<vmem>>, vector<1x128xf32>
    %c7_i32_50 = arith.constant 7 : i32
    %133 = arith.addi %97, %c7_i32_50 : i32
    %134 = arith.index_cast %133 : i32 to index
    %135 = memref.load %arg1[%134] : memref<64xi32, #tpu.memory_space<smem>>
    %136 = arith.index_cast %135 : i32 to index
    %c0_51 = arith.constant 0 : index
    %137 = vector.load %arg2[%136, %c0_51] : memref<32x128xf32, #tpu.memory_space<vmem>>, vector<1x128xf32>
    %138 = tpu.concatenate %102, %107, %112, %117, %122, %127, %132, %137 in 0 : vector<1x128xf32>, vector<1x128xf32>, vector<1x128xf32>, vector<1x128xf32>, vector<1x128xf32>, vector<1x128xf32>, vector<1x128xf32>, vector<1x128xf32> -> vector<8x128xf32>
    %139 = arith.addf %138, %0 : vector<8x128xf32>
    %c2 = arith.constant 2 : index
    %c0_52 = arith.constant 0 : index
    %c0_53 = arith.constant 0 : index
    %140 = vector.load %arg4[%c2, %c0_52, %c0_53] : memref<8x8x128xf32, #tpu.memory_space<vmem>>, vector<1x8x128xf32>
    %141 = vector.shape_cast %140 : vector<1x8x128xf32> to vector<8x128xf32>
    %142 = vector.shape_cast %139 : vector<8x128xf32> to vector<1x8x128xf32>
    tpu.vector_store %arg4[%c2, %c0_52, %c0_53], %142 {strides = array<i32>} : memref<8x8x128xf32, #tpu.memory_space<vmem>>, vector<1x8x128xf32>,
    %c3_i32_54 = arith.constant 3 : i32
    %143 = arith.addi %1, %c3_i32_54 : i32
    %c8_i32_55 = arith.constant 8 : i32
    %144 = arith.muli %143, %c8_i32_55 : i32
    %c0_i32_56 = arith.constant 0 : i32
    %145 = arith.addi %144, %c0_i32_56 : i32
    %146 = arith.index_cast %145 : i32 to index
    %147 = memref.load %arg1[%146] : memref<64xi32, #tpu.memory_space<smem>>
    %148 = arith.index_cast %147 : i32 to index
    %c0_57 = arith.constant 0 : index
    %149 = vector.load %arg2[%148, %c0_57] : memref<32x128xf32, #tpu.memory_space<vmem>>, vector<1x128xf32>
    %c1_i32_58 = arith.constant 1 : i32
    %150 = arith.addi %144, %c1_i32_58 : i32
    %151 = arith.index_cast %150 : i32 to index
    %152 = memref.load %arg1[%151] : memref<64xi32, #tpu.memory_space<smem>>
    %153 = arith.index_cast %152 : i32 to index
    %c0_59 = arith.constant 0 : index
    %154 = vector.load %arg2[%153, %c0_59] : memref<32x128xf32, #tpu.memory_space<vmem>>, vector<1x128xf32>
    %c2_i32_60 = arith.constant 2 : i32
    %155 = arith.addi %144, %c2_i32_60 : i32
    %156 = arith.index_cast %155 : i32 to index
    %157 = memref.load %arg1[%156] : memref<64xi32, #tpu.memory_space<smem>>
    %158 = arith.index_cast %157 : i32 to index
    %c0_61 = arith.constant 0 : index
    %159 = vector.load %arg2[%158, %c0_61] : memref<32x128xf32, #tpu.memory_space<vmem>>, vector<1x128xf32>
    %c3_i32_62 = arith.constant 3 : i32
    %160 = arith.addi %144, %c3_i32_62 : i32
    %161 = arith.index_cast %160 : i32 to index
    %162 = memref.load %arg1[%161] : memref<64xi32, #tpu.memory_space<smem>>
    %163 = arith.index_cast %162 : i32 to index
    %c0_63 = arith.constant 0 : index
    %164 = vector.load %arg2[%163, %c0_63] : memref<32x128xf32, #tpu.memory_space<vmem>>, vector<1x128xf32>
    %c4_i32_64 = arith.constant 4 : i32
    %165 = arith.addi %144, %c4_i32_64 : i32
    %166 = arith.index_cast %165 : i32 to index
    %167 = memref.load %arg1[%166] : memref<64xi32, #tpu.memory_space<smem>>
    %168 = arith.index_cast %167 : i32 to index
    %c0_65 = arith.constant 0 : index
    %169 = vector.load %arg2[%168, %c0_65] : memref<32x128xf32, #tpu.memory_space<vmem>>, vector<1x128xf32>
    %c5_i32_66 = arith.constant 5 : i32
    %170 = arith.addi %144, %c5_i32_66 : i32
    %171 = arith.index_cast %170 : i32 to index
    %172 = memref.load %arg1[%171] : memref<64xi32, #tpu.memory_space<smem>>
    %173 = arith.index_cast %172 : i32 to index
    %c0_67 = arith.constant 0 : index
    %174 = vector.load %arg2[%173, %c0_67] : memref<32x128xf32, #tpu.memory_space<vmem>>, vector<1x128xf32>
    %c6_i32_68 = arith.constant 6 : i32
    %175 = arith.addi %144, %c6_i32_68 : i32
    %176 = arith.index_cast %175 : i32 to index
    %177 = memref.load %arg1[%176] : memref<64xi32, #tpu.memory_space<smem>>
    %178 = arith.index_cast %177 : i32 to index
    %c0_69 = arith.constant 0 : index
    %179 = vector.load %arg2[%178, %c0_69] : memref<32x128xf32, #tpu.memory_space<vmem>>, vector<1x128xf32>
    %c7_i32_70 = arith.constant 7 : i32
    %180 = arith.addi %144, %c7_i32_70 : i32
    %181 = arith.index_cast %180 : i32 to index
    %182 = memref.load %arg1[%181] : memref<64xi32, #tpu.memory_space<smem>>
    %183 = arith.index_cast %182 : i32 to index
    %c0_71 = arith.constant 0 : index
    %184 = vector.load %arg2[%183, %c0_71] : memref<32x128xf32, #tpu.memory_space<vmem>>, vector<1x128xf32>
    %185 = tpu.concatenate %149, %154, %159, %164, %169, %174, %179, %184 in 0 : vector<1x128xf32>, vector<1x128xf32>, vector<1x128xf32>, vector<1x128xf32>, vector<1x128xf32>, vector<1x128xf32>, vector<1x128xf32>, vector<1x128xf32> -> vector<8x128xf32>
    %186 = arith.addf %185, %0 : vector<8x128xf32>
    %c3 = arith.constant 3 : index
    %c0_72 = arith.constant 0 : index
    %c0_73 = arith.constant 0 : index
    %187 = vector.load %arg4[%c3, %c0_72, %c0_73] : memref<8x8x128xf32, #tpu.memory_space<vmem>>, vector<1x8x128xf32>
    %188 = vector.shape_cast %187 : vector<1x8x128xf32> to vector<8x128xf32>
    %189 = vector.shape_cast %186 : vector<8x128xf32> to vector<1x8x128xf32>
    tpu.vector_store %arg4[%c3, %c0_72, %c0_73], %189 {strides = array<i32>} : memref<8x8x128xf32, #tpu.memory_space<vmem>>, vector<1x8x128xf32>,
    %c4_i32_74 = arith.constant 4 : i32
    %190 = arith.addi %1, %c4_i32_74 : i32
    %c8_i32_75 = arith.constant 8 : i32
    %191 = arith.muli %190, %c8_i32_75 : i32
    %c0_i32_76 = arith.constant 0 : i32
    %192 = arith.addi %191, %c0_i32_76 : i32
    %193 = arith.index_cast %192 : i32 to index
    %194 = memref.load %arg1[%193] : memref<64xi32, #tpu.memory_space<smem>>
    %195 = arith.index_cast %194 : i32 to index
    %c0_77 = arith.constant 0 : index
    %196 = vector.load %arg2[%195, %c0_77] : memref<32x128xf32, #tpu.memory_space<vmem>>, vector<1x128xf32>
    %c1_i32_78 = arith.constant 1 : i32
    %197 = arith.addi %191, %c1_i32_78 : i32
    %198 = arith.index_cast %197 : i32 to index
    %199 = memref.load %arg1[%198] : memref<64xi32, #tpu.memory_space<smem>>
    %200 = arith.index_cast %199 : i32 to index
    %c0_79 = arith.constant 0 : index
    %201 = vector.load %arg2[%200, %c0_79] : memref<32x128xf32, #tpu.memory_space<vmem>>, vector<1x128xf32>
    %c2_i32_80 = arith.constant 2 : i32
    %202 = arith.addi %191, %c2_i32_80 : i32
    %203 = arith.index_cast %202 : i32 to index
    %204 = memref.load %arg1[%203] : memref<64xi32, #tpu.memory_space<smem>>
    %205 = arith.index_cast %204 : i32 to index
    %c0_81 = arith.constant 0 : index
    %206 = vector.load %arg2[%205, %c0_81] : memref<32x128xf32, #tpu.memory_space<vmem>>, vector<1x128xf32>
    %c3_i32_82 = arith.constant 3 : i32
    %207 = arith.addi %191, %c3_i32_82 : i32
    %208 = arith.index_cast %207 : i32 to index
    %209 = memref.load %arg1[%208] : memref<64xi32, #tpu.memory_space<smem>>
    %210 = arith.index_cast %209 : i32 to index
    %c0_83 = arith.constant 0 : index
    %211 = vector.load %arg2[%210, %c0_83] : memref<32x128xf32, #tpu.memory_space<vmem>>, vector<1x128xf32>
    %c4_i32_84 = arith.constant 4 : i32
    %212 = arith.addi %191, %c4_i32_84 : i32
    %213 = arith.index_cast %212 : i32 to index
    %214 = memref.load %arg1[%213] : memref<64xi32, #tpu.memory_space<smem>>
    %215 = arith.index_cast %214 : i32 to index
    %c0_85 = arith.constant 0 : index
    %216 = vector.load %arg2[%215, %c0_85] : memref<32x128xf32, #tpu.memory_space<vmem>>, vector<1x128xf32>
    %c5_i32_86 = arith.constant 5 : i32
    %217 = arith.addi %191, %c5_i32_86 : i32
    %218 = arith.index_cast %217 : i32 to index
    %219 = memref.load %arg1[%218] : memref<64xi32, #tpu.memory_space<smem>>
    %220 = arith.index_cast %219 : i32 to index
    %c0_87 = arith.constant 0 : index
    %221 = vector.load %arg2[%220, %c0_87] : memref<32x128xf32, #tpu.memory_space<vmem>>, vector<1x128xf32>
    %c6_i32_88 = arith.constant 6 : i32
    %222 = arith.addi %191, %c6_i32_88 : i32
    %223 = arith.index_cast %222 : i32 to index
    %224 = memref.load %arg1[%223] : memref<64xi32, #tpu.memory_space<smem>>
    %225 = arith.index_cast %224 : i32 to index
    %c0_89 = arith.constant 0 : index
    %226 = vector.load %arg2[%225, %c0_89] : memref<32x128xf32, #tpu.memory_space<vmem>>, vector<1x128xf32>
    %c7_i32_90 = arith.constant 7 : i32
    %227 = arith.addi %191, %c7_i32_90 : i32
    %228 = arith.index_cast %227 : i32 to index
    %229 = memref.load %arg1[%228] : memref<64xi32, #tpu.memory_space<smem>>
    %230 = arith.index_cast %229 : i32 to index
    %c0_91 = arith.constant 0 : index
    %231 = vector.load %arg2[%230, %c0_91] : memref<32x128xf32, #tpu.memory_space<vmem>>, vector<1x128xf32>
    %232 = tpu.concatenate %196, %201, %206, %211, %216, %221, %226, %231 in 0 : vector<1x128xf32>, vector<1x128xf32>, vector<1x128xf32>, vector<1x128xf32>, vector<1x128xf32>, vector<1x128xf32>, vector<1x128xf32>, vector<1x128xf32> -> vector<8x128xf32>
    %233 = arith.addf %232, %0 : vector<8x128xf32>
    %c4 = arith.constant 4 : index
    %c0_92 = arith.constant 0 : index
    %c0_93 = arith.constant 0 : index
    %234 = vector.load %arg4[%c4, %c0_92, %c0_93] : memref<8x8x128xf32, #tpu.memory_space<vmem>>, vector<1x8x128xf32>
    %235 = vector.shape_cast %234 : vector<1x8x128xf32> to vector<8x128xf32>
    %236 = vector.shape_cast %233 : vector<8x128xf32> to vector<1x8x128xf32>
    tpu.vector_store %arg4[%c4, %c0_92, %c0_93], %236 {strides = array<i32>} : memref<8x8x128xf32, #tpu.memory_space<vmem>>, vector<1x8x128xf32>,
    %c5_i32_94 = arith.constant 5 : i32
    %237 = arith.addi %1, %c5_i32_94 : i32
    %c8_i32_95 = arith.constant 8 : i32
    %238 = arith.muli %237, %c8_i32_95 : i32
    %c0_i32_96 = arith.constant 0 : i32
    %239 = arith.addi %238, %c0_i32_96 : i32
    %240 = arith.index_cast %239 : i32 to index
    %241 = memref.load %arg1[%240] : memref<64xi32, #tpu.memory_space<smem>>
    %242 = arith.index_cast %241 : i32 to index
    %c0_97 = arith.constant 0 : index
    %243 = vector.load %arg2[%242, %c0_97] : memref<32x128xf32, #tpu.memory_space<vmem>>, vector<1x128xf32>
    %c1_i32_98 = arith.constant 1 : i32
    %244 = arith.addi %238, %c1_i32_98 : i32
    %245 = arith.index_cast %244 : i32 to index
    %246 = memref.load %arg1[%245] : memref<64xi32, #tpu.memory_space<smem>>
    %247 = arith.index_cast %246 : i32 to index
    %c0_99 = arith.constant 0 : index
    %248 = vector.load %arg2[%247, %c0_99] : memref<32x128xf32, #tpu.memory_space<vmem>>, vector<1x128xf32>
    %c2_i32_100 = arith.constant 2 : i32
    %249 = arith.addi %238, %c2_i32_100 : i32
    %250 = arith.index_cast %249 : i32 to index
    %251 = memref.load %arg1[%250] : memref<64xi32, #tpu.memory_space<smem>>
    %252 = arith.index_cast %251 : i32 to index
    %c0_101 = arith.constant 0 : index
    %253 = vector.load %arg2[%252, %c0_101] : memref<32x128xf32, #tpu.memory_space<vmem>>, vector<1x128xf32>
    %c3_i32_102 = arith.constant 3 : i32
    %254 = arith.addi %238, %c3_i32_102 : i32
    %255 = arith.index_cast %254 : i32 to index
    %256 = memref.load %arg1[%255] : memref<64xi32, #tpu.memory_space<smem>>
    %257 = arith.index_cast %256 : i32 to index
    %c0_103 = arith.constant 0 : index
    %258 = vector.load %arg2[%257, %c0_103] : memref<32x128xf32, #tpu.memory_space<vmem>>, vector<1x128xf32>
    %c4_i32_104 = arith.constant 4 : i32
    %259 = arith.addi %238, %c4_i32_104 : i32
    %260 = arith.index_cast %259 : i32 to index
    %261 = memref.load %arg1[%260] : memref<64xi32, #tpu.memory_space<smem>>
    %262 = arith.index_cast %261 : i32 to index
    %c0_105 = arith.constant 0 : index
    %263 = vector.load %arg2[%262, %c0_105] : memref<32x128xf32, #tpu.memory_space<vmem>>, vector<1x128xf32>
    %c5_i32_106 = arith.constant 5 : i32
    %264 = arith.addi %238, %c5_i32_106 : i32
    %265 = arith.index_cast %264 : i32 to index
    %266 = memref.load %arg1[%265] : memref<64xi32, #tpu.memory_space<smem>>
    %267 = arith.index_cast %266 : i32 to index
    %c0_107 = arith.constant 0 : index
    %268 = vector.load %arg2[%267, %c0_107] : memref<32x128xf32, #tpu.memory_space<vmem>>, vector<1x128xf32>
    %c6_i32_108 = arith.constant 6 : i32
    %269 = arith.addi %238, %c6_i32_108 : i32
    %270 = arith.index_cast %269 : i32 to index
    %271 = memref.load %arg1[%270] : memref<64xi32, #tpu.memory_space<smem>>
    %272 = arith.index_cast %271 : i32 to index
    %c0_109 = arith.constant 0 : index
    %273 = vector.load %arg2[%272, %c0_109] : memref<32x128xf32, #tpu.memory_space<vmem>>, vector<1x128xf32>
    %c7_i32_110 = arith.constant 7 : i32
    %274 = arith.addi %238, %c7_i32_110 : i32
    %275 = arith.index_cast %274 : i32 to index
    %276 = memref.load %arg1[%275] : memref<64xi32, #tpu.memory_space<smem>>
    %277 = arith.index_cast %276 : i32 to index
    %c0_111 = arith.constant 0 : index
    %278 = vector.load %arg2[%277, %c0_111] : memref<32x128xf32, #tpu.memory_space<vmem>>, vector<1x128xf32>
    %279 = tpu.concatenate %243, %248, %253, %258, %263, %268, %273, %278 in 0 : vector<1x128xf32>, vector<1x128xf32>, vector<1x128xf32>, vector<1x128xf32>, vector<1x128xf32>, vector<1x128xf32>, vector<1x128xf32>, vector<1x128xf32> -> vector<8x128xf32>
    %280 = arith.addf %279, %0 : vector<8x128xf32>
    %c5 = arith.constant 5 : index
    %c0_112 = arith.constant 0 : index
    %c0_113 = arith.constant 0 : index
    %281 = vector.load %arg4[%c5, %c0_112, %c0_113] : memref<8x8x128xf32, #tpu.memory_space<vmem>>, vector<1x8x128xf32>
    %282 = vector.shape_cast %281 : vector<1x8x128xf32> to vector<8x128xf32>
    %283 = vector.shape_cast %280 : vector<8x128xf32> to vector<1x8x128xf32>
    tpu.vector_store %arg4[%c5, %c0_112, %c0_113], %283 {strides = array<i32>} : memref<8x8x128xf32, #tpu.memory_space<vmem>>, vector<1x8x128xf32>,
    %c6_i32_114 = arith.constant 6 : i32
    %284 = arith.addi %1, %c6_i32_114 : i32
    %c8_i32_115 = arith.constant 8 : i32
    %285 = arith.muli %284, %c8_i32_115 : i32
    %c0_i32_116 = arith.constant 0 : i32
    %286 = arith.addi %285, %c0_i32_116 : i32
    %287 = arith.index_cast %286 : i32 to index
    %288 = memref.load %arg1[%287] : memref<64xi32, #tpu.memory_space<smem>>
    %289 = arith.index_cast %288 : i32 to index
    %c0_117 = arith.constant 0 : index
    %290 = vector.load %arg2[%289, %c0_117] : memref<32x128xf32, #tpu.memory_space<vmem>>, vector<1x128xf32>
    %c1_i32_118 = arith.constant 1 : i32
    %291 = arith.addi %285, %c1_i32_118 : i32
    %292 = arith.index_cast %291 : i32 to index
    %293 = memref.load %arg1[%292] : memref<64xi32, #tpu.memory_space<smem>>
    %294 = arith.index_cast %293 : i32 to index
    %c0_119 = arith.constant 0 : index
    %295 = vector.load %arg2[%294, %c0_119] : memref<32x128xf32, #tpu.memory_space<vmem>>, vector<1x128xf32>
    %c2_i32_120 = arith.constant 2 : i32
    %296 = arith.addi %285, %c2_i32_120 : i32
    %297 = arith.index_cast %296 : i32 to index
    %298 = memref.load %arg1[%297] : memref<64xi32, #tpu.memory_space<smem>>
    %299 = arith.index_cast %298 : i32 to index
    %c0_121 = arith.constant 0 : index
    %300 = vector.load %arg2[%299, %c0_121] : memref<32x128xf32, #tpu.memory_space<vmem>>, vector<1x128xf32>
    %c3_i32_122 = arith.constant 3 : i32
    %301 = arith.addi %285, %c3_i32_122 : i32
    %302 = arith.index_cast %301 : i32 to index
    %303 = memref.load %arg1[%302] : memref<64xi32, #tpu.memory_space<smem>>
    %304 = arith.index_cast %303 : i32 to index
    %c0_123 = arith.constant 0 : index
    %305 = vector.load %arg2[%304, %c0_123] : memref<32x128xf32, #tpu.memory_space<vmem>>, vector<1x128xf32>
    %c4_i32_124 = arith.constant 4 : i32
    %306 = arith.addi %285, %c4_i32_124 : i32
    %307 = arith.index_cast %306 : i32 to index
    %308 = memref.load %arg1[%307] : memref<64xi32, #tpu.memory_space<smem>>
    %309 = arith.index_cast %308 : i32 to index
    %c0_125 = arith.constant 0 : index
    %310 = vector.load %arg2[%309, %c0_125] : memref<32x128xf32, #tpu.memory_space<vmem>>, vector<1x128xf32>
    %c5_i32_126 = arith.constant 5 : i32
    %311 = arith.addi %285, %c5_i32_126 : i32
    %312 = arith.index_cast %311 : i32 to index
    %313 = memref.load %arg1[%312] : memref<64xi32, #tpu.memory_space<smem>>
    %314 = arith.index_cast %313 : i32 to index
    %c0_127 = arith.constant 0 : index
    %315 = vector.load %arg2[%314, %c0_127] : memref<32x128xf32, #tpu.memory_space<vmem>>, vector<1x128xf32>
    %c6_i32_128 = arith.constant 6 : i32
    %316 = arith.addi %285, %c6_i32_128 : i32
    %317 = arith.index_cast %316 : i32 to index
    %318 = memref.load %arg1[%317] : memref<64xi32, #tpu.memory_space<smem>>
    %319 = arith.index_cast %318 : i32 to index
    %c0_129 = arith.constant 0 : index
    %320 = vector.load %arg2[%319, %c0_129] : memref<32x128xf32, #tpu.memory_space<vmem>>, vector<1x128xf32>
    %c7_i32_130 = arith.constant 7 : i32
    %321 = arith.addi %285, %c7_i32_130 : i32
    %322 = arith.index_cast %321 : i32 to index
    %323 = memref.load %arg1[%322] : memref<64xi32, #tpu.memory_space<smem>>
    %324 = arith.index_cast %323 : i32 to index
    %c0_131 = arith.constant 0 : index
    %325 = vector.load %arg2[%324, %c0_131] : memref<32x128xf32, #tpu.memory_space<vmem>>, vector<1x128xf32>
    %326 = tpu.concatenate %290, %295, %300, %305, %310, %315, %320, %325 in 0 : vector<1x128xf32>, vector<1x128xf32>, vector<1x128xf32>, vector<1x128xf32>, vector<1x128xf32>, vector<1x128xf32>, vector<1x128xf32>, vector<1x128xf32> -> vector<8x128xf32>
    %327 = arith.addf %326, %0 : vector<8x128xf32>
    %c6 = arith.constant 6 : index
    %c0_132 = arith.constant 0 : index
    %c0_133 = arith.constant 0 : index
    %328 = vector.load %arg4[%c6, %c0_132, %c0_133] : memref<8x8x128xf32, #tpu.memory_space<vmem>>, vector<1x8x128xf32>
    %329 = vector.shape_cast %328 : vector<1x8x128xf32> to vector<8x128xf32>
    %330 = vector.shape_cast %327 : vector<8x128xf32> to vector<1x8x128xf32>
    tpu.vector_store %arg4[%c6, %c0_132, %c0_133], %330 {strides = array<i32>} : memref<8x8x128xf32, #tpu.memory_space<vmem>>, vector<1x8x128xf32>,
    %c7_i32_134 = arith.constant 7 : i32
    %331 = arith.addi %1, %c7_i32_134 : i32
    %c8_i32_135 = arith.constant 8 : i32
    %332 = arith.muli %331, %c8_i32_135 : i32
    %c0_i32_136 = arith.constant 0 : i32
    %333 = arith.addi %332, %c0_i32_136 : i32
    %334 = arith.index_cast %333 : i32 to index
    %335 = memref.load %arg1[%334] : memref<64xi32, #tpu.memory_space<smem>>
    %336 = arith.index_cast %335 : i32 to index
    %c0_137 = arith.constant 0 : index
    %337 = vector.load %arg2[%336, %c0_137] : memref<32x128xf32, #tpu.memory_space<vmem>>, vector<1x128xf32>
    %c1_i32_138 = arith.constant 1 : i32
    %338 = arith.addi %332, %c1_i32_138 : i32
    %339 = arith.index_cast %338 : i32 to index
    %340 = memref.load %arg1[%339] : memref<64xi32, #tpu.memory_space<smem>>
    %341 = arith.index_cast %340 : i32 to index
    %c0_139 = arith.constant 0 : index
    %342 = vector.load %arg2[%341, %c0_139] : memref<32x128xf32, #tpu.memory_space<vmem>>, vector<1x128xf32>
    %c2_i32_140 = arith.constant 2 : i32
    %343 = arith.addi %332, %c2_i32_140 : i32
    %344 = arith.index_cast %343 : i32 to index
    %345 = memref.load %arg1[%344] : memref<64xi32, #tpu.memory_space<smem>>
    %346 = arith.index_cast %345 : i32 to index
    %c0_141 = arith.constant 0 : index
    %347 = vector.load %arg2[%346, %c0_141] : memref<32x128xf32, #tpu.memory_space<vmem>>, vector<1x128xf32>
    %c3_i32_142 = arith.constant 3 : i32
    %348 = arith.addi %332, %c3_i32_142 : i32
    %349 = arith.index_cast %348 : i32 to index
    %350 = memref.load %arg1[%349] : memref<64xi32, #tpu.memory_space<smem>>
    %351 = arith.index_cast %350 : i32 to index
    %c0_143 = arith.constant 0 : index
    %352 = vector.load %arg2[%351, %c0_143] : memref<32x128xf32, #tpu.memory_space<vmem>>, vector<1x128xf32>
    %c4_i32_144 = arith.constant 4 : i32
    %353 = arith.addi %332, %c4_i32_144 : i32
    %354 = arith.index_cast %353 : i32 to index
    %355 = memref.load %arg1[%354] : memref<64xi32, #tpu.memory_space<smem>>
    %356 = arith.index_cast %355 : i32 to index
    %c0_145 = arith.constant 0 : index
    %357 = vector.load %arg2[%356, %c0_145] : memref<32x128xf32, #tpu.memory_space<vmem>>, vector<1x128xf32>
    %c5_i32_146 = arith.constant 5 : i32
    %358 = arith.addi %332, %c5_i32_146 : i32
    %359 = arith.index_cast %358 : i32 to index
    %360 = memref.load %arg1[%359] : memref<64xi32, #tpu.memory_space<smem>>
    %361 = arith.index_cast %360 : i32 to index
    %c0_147 = arith.constant 0 : index
    %362 = vector.load %arg2[%361, %c0_147] : memref<32x128xf32, #tpu.memory_space<vmem>>, vector<1x128xf32>
    %c6_i32_148 = arith.constant 6 : i32
    %363 = arith.addi %332, %c6_i32_148 : i32
    %364 = arith.index_cast %363 : i32 to index
    %365 = memref.load %arg1[%364] : memref<64xi32, #tpu.memory_space<smem>>
    %366 = arith.index_cast %365 : i32 to index
    %c0_149 = arith.constant 0 : index
    %367 = vector.load %arg2[%366, %c0_149] : memref<32x128xf32, #tpu.memory_space<vmem>>, vector<1x128xf32>
    %c7_i32_150 = arith.constant 7 : i32
    %368 = arith.addi %332, %c7_i32_150 : i32
    %369 = arith.index_cast %368 : i32 to index
    %370 = memref.load %arg1[%369] : memref<64xi32, #tpu.memory_space<smem>>
    %371 = arith.index_cast %370 : i32 to index
    %c0_151 = arith.constant 0 : index
    %372 = vector.load %arg2[%371, %c0_151] : memref<32x128xf32, #tpu.memory_space<vmem>>, vector<1x128xf32>
    %373 = tpu.concatenate %337, %342, %347, %352, %357, %362, %367, %372 in 0 : vector<1x128xf32>, vector<1x128xf32>, vector<1x128xf32>, vector<1x128xf32>, vector<1x128xf32>, vector<1x128xf32>, vector<1x128xf32>, vector<1x128xf32> -> vector<8x128xf32>
    %374 = arith.addf %373, %0 : vector<8x128xf32>
    %c7 = arith.constant 7 : index
    %c0_152 = arith.constant 0 : index
    %c0_153 = arith.constant 0 : index
    %375 = vector.load %arg4[%c7, %c0_152, %c0_153] : memref<8x8x128xf32, #tpu.memory_space<vmem>>, vector<1x8x128xf32>
    %376 = vector.shape_cast %375 : vector<1x8x128xf32> to vector<8x128xf32>
    %377 = vector.shape_cast %374 : vector<8x128xf32> to vector<1x8x128xf32>
    tpu.vector_store %arg4[%c7, %c0_152, %c0_153], %377 {strides = array<i32>} : memref<8x8x128xf32, #tpu.memory_space<vmem>>, vector<1x8x128xf32>,
    return
  }
  func.func @transform_0(%arg0: i32, %arg1: memref<64xi32, #tpu.memory_space<smem>>) -> (i32, i32) {
    %c0_i32 = arith.constant 0 : i32
    %c0_i32_0 = arith.constant 0 : i32
    %c0_i32_1 = arith.constant 0 : i32
    return %c0_i32, %c0_i32_0 : i32, i32
  }
  func.func @transform_1(%arg0: i32, %arg1: memref<64xi32, #tpu.memory_space<smem>>) -> (i32, i32) {
    %c0_i32 = arith.constant 0 : i32
    %c0_i32_0 = arith.constant 0 : i32
    %c0_i32_1 = arith.constant 0 : i32
    return %c0_i32, %c0_i32_0 : i32, i32
  }
  func.func @transform_2(%arg0: i32, %arg1: memref<64xi32, #tpu.memory_space<smem>>) -> (i32, i32, i32) {
    %c0_i32 = arith.constant 0 : i32
    %c0_i32_0 = arith.constant 0 : i32
    %c0_i32_1 = arith.constant 0 : i32
    return %arg0, %c0_i32, %c0_i32_0 : i32, i32, i32
  }
}

</mosaic_0001>

<llo_original>
// kernel: tpu_custom_call.1
$region0: #{tpu_custom_call.1}
  #allocation0 [shape = 'u32[]', space=smem, size = 0x4, offset = 0x4, fixed_abs, tag = 'smem constant byte address 0x4 - core index']
  #allocation1 [shape = 'u32[144,128]{1,0:T(1,128)}', space=vmem, size = 0x12000, scoped, tag = 'internal scratch']
  #allocation2 [shape = 's32[1]{0}', space=sflag, size = 0x4, scoped, tag = 'scoped memory for tpu_custom_call.1']
  #allocation3 [shape = 'u8[512]{0}', space=smem, size = 0x200, scoped, tag = 'prefetched SMEM operand 0']
  %s0 = inlined_call_operand.hbm [shape: s32[64], index: 0, kind: input, shape index: {}]
  %s1 = inlined_call_operand.hbm [shape: f32[32,128], index: 1, kind: input, shape index: {}]
  %s2 = inlined_call_operand.hbm [shape: f32[8,128], index: 2, kind: input, shape index: {}]
  %s3 = inlined_call_operand.hbm [shape: f32[8,8,128], index: 3, kind: output, shape index: {}]
  %s4 = sld [smem:[#allocation0]]
  $region26: #{tpu_custom_call.1} parent=0
    _
  %s6 = ssub.s32 1, %s4
  %s7 = scalar_select 0, %s6, %s4
  %9 = dma.hbm_to_smem %s0, 16, [#allocation3], [#allocation2]
  %10 = dma.done [#allocation2], 16
  %11 = sfence
  $region1: #{tpu_custom_call.1} parent=0
    #allocation4 [shape = 'u8[16384]{0}', space=vmem, size = 0x4000, scoped, tag = 'input window, operand 1, single buffered']
    #allocation5 [shape = 's32[1]{0}', space=sflag, size = 0x4, scoped, tag = 'scoped memory for tpu_custom_call.1']
    #allocation6 [shape = 's32[1]{0}', space=sflag, size = 0x4, scoped, tag = 'scoped memory for tpu_custom_call.1']
    #allocation7 [shape = 'u8[4096]{0}', space=vmem, size = 0x1000, scoped, tag = 'input window, operand 2, single buffered']
    #allocation8 [shape = 's32[1]{0}', space=sflag, size = 0x4, scoped, tag = 'scoped memory for tpu_custom_call.1']
    #allocation9 [shape = 'u8[32768]{0}', space=vmem, size = 0x8000, scoped, tag = 'output window, operand 0, single buffered']
    %12 = vsyncpa [#allocation5], 0
    %13 = vsyncpa [#allocation8], 0
    %14 = vsyncpa [#allocation6], 0
    // Predicated region
    $region2: #{tpu_custom_call.1} parent=1 // pred_check
      _
    $region3: #{tpu_custom_call.1} parent=1 // pred_check_branch
      %16 = sbr.rel (0) target = $region5
    $region4: #{tpu_custom_call.1} parent=1 // pred_region
      %s18 = ssub.s32 512, 512
      %19 = vsyncadd [#allocation5], %s18
      %s20 = sshll.u32 [#allocation4], 4
      %s21 = int_to_ptr.vmem [resolvable:$true] %s20
      %26 = dma.hbm_to_vmem [thread:$0]  %s1, 512, %s21, [#allocation5], 128, 128, 8
    $region5: #{tpu_custom_call.1} parent=1 // pred_fallthru
      _
    // Predicated region
    $region6: #{tpu_custom_call.1} parent=1 // pred_check
      _
    $region7: #{tpu_custom_call.1} parent=1 // pred_check_branch
      %28 = sbr.rel (0) target = $region9
    $region8: #{tpu_custom_call.1} parent=1 // pred_region
      %s30 = ssub.s32 128, 128
      %31 = vsyncadd [#allocation8], %s30
      %s33 = sshll.u32 [#allocation7], 4
      %s34 = int_to_ptr.vmem [resolvable:$true] %s33
      %36 = dma.hbm_to_vmem [thread:$0]  %s2, 128, %s34, [#allocation8]
    $region9: #{tpu_custom_call.1} parent=1 // pred_fallthru
      _
    // Predicated region
    $region10: #{tpu_custom_call.1} parent=1 // pred_check
      _
    $region11: #{tpu_custom_call.1} parent=1 // pred_check_branch
      %38 = sbr.rel (0) target = $region13
    $region12: #{tpu_custom_call.1} parent=1 // pred_region
      %39 = dma.done [#allocation5], 512
    $region13: #{tpu_custom_call.1} parent=1 // pred_fallthru
      _
    // Predicated region
    $region14: #{tpu_custom_call.1} parent=1 // pred_check
      _
    $region15: #{tpu_custom_call.1} parent=1 // pred_check_branch
      %41 = sbr.rel (0) target = $region17
    $region16: #{tpu_custom_call.1} parent=1 // pred_region
      %42 = dma.done [#allocation8], 128
    $region17: #{tpu_custom_call.1} parent=1 // pred_fallthru
      _
    %v43 = vld [vmem:[#allocation7] sm:$0xff]
    %s44 = smul.u32 0, 8
    %s45 = smul.u32 0, 64
    %s46 = sld [smem:[#allocation3 + %s45]]
    %s47 = scalar_lea.vmem [#allocation4], %s46
    %v48 = vld [vmem:[%s47] sm:$0x1]
    %s49 = sadd.s32 %s45, 1
    %s50 = sld [smem:[#allocation3 + %s49]]
    %s51 = scalar_lea.vmem [#allocation4], %s50
    %v52 = vld [vmem:[%s51] sm:$0x1]
    %s53 = sadd.s32 %s45, 2
    %s54 = sld [smem:[#allocation3 + %s53]]
    %s55 = scalar_lea.vmem [#allocation4], %s54
    %v56 = vld [vmem:[%s55] sm:$0x1]
    %s57 = sadd.s32 %s45, 3
    %s58 = sld [smem:[#allocation3 + %s57]]
    %s59 = scalar_lea.vmem [#allocation4], %s58
    %v60 = vld [vmem:[%s59] sm:$0x1]
    %s61 = sadd.s32 %s45, 4
    %s62 = sld [smem:[#allocation3 + %s61]]
    %s63 = scalar_lea.vmem [#allocation4], %s62
    %v64 = vld [vmem:[%s63] sm:$0x1]
    %s65 = sadd.s32 %s45, 5
    %s66 = sld [smem:[#allocation3 + %s65]]
    %s67 = scalar_lea.vmem [#allocation4], %s66
    %v68 = vld [vmem:[%s67] sm:$0x1]
    %s69 = sadd.s32 %s45, 6
    %s70 = sld [smem:[#allocation3 + %s69]]
    %s71 = scalar_lea.vmem [#allocation4], %s70
    %v72 = vld [vmem:[%s71] sm:$0x1]
    %s73 = sadd.s32 %s45, 7
    %s74 = sld [smem:[#allocation3 + %s73]]
    %s75 = scalar_lea.vmem [#allocation4], %s74
    %v76 = vld [vmem:[%s75] sm:$0x1]
    %v78 = vrot.slane %v52, 7
    %v81 = vrot.slane %v56, 6
    %v84 = vrot.slane %v60, 5
    %v87 = vrot.slane %v64, 4
    %v90 = vrot.slane %v68, 3
    %v93 = vrot.slane %v72, 2
    %v96 = vrot.slane %v76, 1
    %vm98 = vcmask 1040384
    %v99 = vsel %vm98, %v48, %v78
    %vm100 = vcmask 1041408
    %v101 = vsel %vm100, %v99, %v81
    %vm102 = vcmask 1042432
    %v103 = vsel %vm102, %v101, %v84
    %vm104 = vcmask 1043456
    %v105 = vsel %vm104, %v103, %v87
    %vm106 = vcmask 1044480
    %v107 = vsel %vm106, %v105, %v90
    %vm108 = vcmask 1045504
    %v109 = vsel %vm108, %v107, %v93
    %vm110 = vcmask 1046528
    %v111 = vsel %vm110, %v109, %v96
    %v112 = vadd.f32 %v111, %v43
    %113 = vst [vmem:[#allocation9] sm:$0xff] %v112
    %s114 = sadd.s32 %s44, 1
    %s115 = smul.u32 %s114, 8
    %s116 = sld [smem:[#allocation3 + %s115]]
    %s117 = scalar_lea.vmem [#allocation4], %s116
    %v118 = vld [vmem:[%s117] sm:$0x1]
    %s119 = sadd.s32 %s115, 1
    %s120 = sld [smem:[#allocation3 + %s119]]
    %s121 = scalar_lea.vmem [#allocation4], %s120
    %v122 = vld [vmem:[%s121] sm:$0x1]
    %s123 = sadd.s32 %s115, 2
    %s124 = sld [smem:[#allocation3 + %s123]]
    %s125 = scalar_lea.vmem [#allocation4], %s124
    %v126 = vld [vmem:[%s125] sm:$0x1]
    %s127 = sadd.s32 %s115, 3
    %s128 = sld [smem:[#allocation3 + %s127]]
    %s129 = scalar_lea.vmem [#allocation4], %s128
    %v130 = vld [vmem:[%s129] sm:$0x1]
    %s131 = sadd.s32 %s115, 4
    %s132 = sld [smem:[#allocation3 + %s131]]
    %s133 = scalar_lea.vmem [#allocation4], %s132
    %v134 = vld [vmem:[%s133] sm:$0x1]
    %s135 = sadd.s32 %s115, 5
    %s136 = sld [smem:[#allocation3 + %s135]]
    %s137 = scalar_lea.vmem [#allocation4], %s136
    %v138 = vld [vmem:[%s137] sm:$0x1]
    %s139 = sadd.s32 %s115, 6
    %s140 = sld [smem:[#allocation3 + %s139]]
    %s141 = scalar_lea.vmem [#allocation4], %s140
    %v142 = vld [vmem:[%s141] sm:$0x1]
    %s143 = sadd.s32 %s115, 7
    %s144 = sld [smem:[#allocation3 + %s143]]
    %s145 = scalar_lea.vmem [#allocation4], %s144
    %v146 = vld [vmem:[%s145] sm:$0x1]
    %v148 = vrot.slane %v122, 7
    %v151 = vrot.slane %v126, 6
    %v154 = vrot.slane %v130, 5
    %v157 = vrot.slane %v134, 4
    %v160 = vrot.slane %v138, 3
    %v163 = vrot.slane %v142, 2
    %v166 = vrot.slane %v146, 1
    %v168 = vsel %vm98, %v118, %v148
    %v169 = vsel %vm100, %v168, %v151
    %v170 = vsel %vm102, %v169, %v154
    %v171 = vsel %vm104, %v170, %v157
    %v172 = vsel %vm106, %v171, %v160
    %v173 = vsel %vm108, %v172, %v163
    %v174 = vsel %vm110, %v173, %v166
    %v175 = vadd.f32 %v174, %v43
    %s176 = scalar_lea.vmem [#allocation9], 8
    %177 = vst [vmem:[%s176] sm:$0xff] %v175
    %s178 = sadd.s32 %s44, 2
    %s179 = smul.u32 %s178, 8
    %s180 = sld [smem:[#allocation3 + %s179]]
    %s181 = scalar_lea.vmem [#allocation4], %s180
    %v182 = vld [vmem:[%s181] sm:$0x1]
    %s183 = sadd.s32 %s179, 1
    %s184 = sld [smem:[#allocation3 + %s183]]
    %s185 = scalar_lea.vmem [#allocation4], %s184
    %v186 = vld [vmem:[%s185] sm:$0x1]
    %s187 = sadd.s32 %s179, 2
    %s188 = sld [smem:[#allocation3 + %s187]]
    %s189 = scalar_lea.vmem [#allocation4], %s188
    %v190 = vld [vmem:[%s189] sm:$0x1]
    %s191 = sadd.s32 %s179, 3
    %s192 = sld [smem:[#allocation3 + %s191]]
    %s193 = scalar_lea.vmem [#allocation4], %s192
    %v194 = vld [vmem:[%s193] sm:$0x1]
    %s195 = sadd.s32 %s179, 4
    %s196 = sld [smem:[#allocation3 + %s195]]
    %s197 = scalar_lea.vmem [#allocation4], %s196
    %v198 = vld [vmem:[%s197] sm:$0x1]
    %s199 = sadd.s32 %s179, 5
    %s200 = sld [smem:[#allocation3 + %s199]]
    %s201 = scalar_lea.vmem [#allocation4], %s200
    %v202 = vld [vmem:[%s201] sm:$0x1]
    %s203 = sadd.s32 %s179, 6
    %s204 = sld [smem:[#allocation3 + %s203]]
    %s205 = scalar_lea.vmem [#allocation4], %s204
    %v206 = vld [vmem:[%s205] sm:$0x1]
    %s207 = sadd.s32 %s179, 7
    %s208 = sld [smem:[#allocation3 + %s207]]
    %s209 = scalar_lea.vmem [#allocation4], %s208
    %v210 = vld [vmem:[%s209] sm:$0x1]
    %v212 = vrot.slane %v186, 7
    %v215 = vrot.slane %v190, 6
    %v218 = vrot.slane %v194, 5
    %v221 = vrot.slane %v198, 4
    %v224 = vrot.slane %v202, 3
    %v227 = vrot.slane %v206, 2
    %v230 = vrot.slane %v210, 1
    %v232 = vsel %vm98, %v182, %v212
    %v233 = vsel %vm100, %v232, %v215
    %v234 = vsel %vm102, %v233, %v218
    %v235 = vsel %vm104, %v234, %v221
    %v236 = vsel %vm106, %v235, %v224
    %v237 = vsel %vm108, %v236, %v227
    %v238 = vsel %vm110, %v237, %v230
    %v239 = vadd.f32 %v238, %v43
    %s240 = scalar_lea.vmem [#allocation9], 16
    %241 = vst [vmem:[%s240] sm:$0xff] %v239
    %s242 = sadd.s32 %s44, 3
    %s243 = smul.u32 %s242, 8
    %s244 = sld [smem:[#allocation3 + %s243]]
    %s245 = scalar_lea.vmem [#allocation4], %s244
    %v246 = vld [vmem:[%s245] sm:$0x1]
    %s247 = sadd.s32 %s243, 1
    %s248 = sld [smem:[#allocation3 + %s247]]
    %s249 = scalar_lea.vmem [#allocation4], %s248
    %v250 = vld [vmem:[%s249] sm:$0x1]
    %s251 = sadd.s32 %s243, 2
    %s252 = sld [smem:[#allocation3 + %s251]]
    %s253 = scalar_lea.vmem [#allocation4], %s252
    %v254 = vld [vmem:[%s253] sm:$0x1]
    %s255 = sadd.s32 %s243, 3
    %s256 = sld [smem:[#allocation3 + %s255]]
    %s257 = scalar_lea.vmem [#allocation4], %s256
    %v258 = vld [vmem:[%s257] sm:$0x1]
    %s259 = sadd.s32 %s243, 4
    %s260 = sld [smem:[#allocation3 + %s259]]
    %s261 = scalar_lea.vmem [#allocation4], %s260
    %v262 = vld [vmem:[%s261] sm:$0x1]
    %s263 = sadd.s32 %s243, 5
    %s264 = sld [smem:[#allocation3 + %s263]]
    %s265 = scalar_lea.vmem [#allocation4], %s264
    %v266 = vld [vmem:[%s265] sm:$0x1]
    %s267 = sadd.s32 %s243, 6
    %s268 = sld [smem:[#allocation3 + %s267]]
    %s269 = scalar_lea.vmem [#allocation4], %s268
    %v270 = vld [vmem:[%s269] sm:$0x1]
    %s271 = sadd.s32 %s243, 7
    %s272 = sld [smem:[#allocation3 + %s271]]
    %s273 = scalar_lea.vmem [#allocation4], %s272
    %v274 = vld [vmem:[%s273] sm:$0x1]
    %v276 = vrot.slane %v250, 7
    %v279 = vrot.slane %v254, 6
    %v282 = vrot.slane %v258, 5
    %v285 = vrot.slane %v262, 4
    %v288 = vrot.slane %v266, 3
    %v291 = vrot.slane %v270, 2
    %v294 = vrot.slane %v274, 1
    %v296 = vsel %vm98, %v246, %v276
    %v297 = vsel %vm100, %v296, %v279
    %v298 = vsel %vm102, %v297, %v282
    %v299 = vsel %vm104, %v298, %v285
    %v300 = vsel %vm106, %v299, %v288
    %v301 = vsel %vm108, %v300, %v291
    %v302 = vsel %vm110, %v301, %v294
    %v303 = vadd.f32 %v302, %v43
    %s304 = scalar_lea.vmem [#allocation9], 24
    %305 = vst [vmem:[%s304] sm:$0xff] %v303
    %s306 = sadd.s32 %s44, 4
    %s307 = smul.u32 %s306, 8
    %s308 = sld [smem:[#allocation3 + %s307]]
    %s309 = scalar_lea.vmem [#allocation4], %s308
    %v310 = vld [vmem:[%s309] sm:$0x1]
    %s311 = sadd.s32 %s307, 1
    %s312 = sld [smem:[#allocation3 + %s311]]
    %s313 = scalar_lea.vmem [#allocation4], %s312
    %v314 = vld [vmem:[%s313] sm:$0x1]
    %s315 = sadd.s32 %s307, 2
    %s316 = sld [smem:[#allocation3 + %s315]]
    %s317 = scalar_lea.vmem [#allocation4], %s316
    %v318 = vld [vmem:[%s317] sm:$0x1]
    %s319 = sadd.s32 %s307, 3
    %s320 = sld [smem:[#allocation3 + %s319]]
    %s321 = scalar_lea.vmem [#allocation4], %s320
    %v322 = vld [vmem:[%s321] sm:$0x1]
    %s323 = sadd.s32 %s307, 4
    %s324 = sld [smem:[#allocation3 + %s323]]
    %s325 = scalar_lea.vmem [#allocation4], %s324
    %v326 = vld [vmem:[%s325] sm:$0x1]
    %s327 = sadd.s32 %s307, 5
    %s328 = sld [smem:[#allocation3 + %s327]]
    %s329 = scalar_lea.vmem [#allocation4], %s328
    %v330 = vld [vmem:[%s329] sm:$0x1]
    %s331 = sadd.s32 %s307, 6
    %s332 = sld [smem:[#allocation3 + %s331]]
    %s333 = scalar_lea.vmem [#allocation4], %s332
    %v334 = vld [vmem:[%s333] sm:$0x1]
    %s335 = sadd.s32 %s307, 7
    %s336 = sld [smem:[#allocation3 + %s335]]
    %s337 = scalar_lea.vmem [#allocation4], %s336
    %v338 = vld [vmem:[%s337] sm:$0x1]
    %v340 = vrot.slane %v314, 7
    %v343 = vrot.slane %v318, 6
    %v346 = vrot.slane %v322, 5
    %v349 = vrot.slane %v326, 4
    %v352 = vrot.slane %v330, 3
    %v355 = vrot.slane %v334, 2
    %v358 = vrot.slane %v338, 1
    %v360 = vsel %vm98, %v310, %v340
    %v361 = vsel %vm100, %v360, %v343
    %v362 = vsel %vm102, %v361, %v346
    %v363 = vsel %vm104, %v362, %v349
    %v364 = vsel %vm106, %v363, %v352
    %v365 = vsel %vm108, %v364, %v355
    %v366 = vsel %vm110, %v365, %v358
    %v367 = vadd.f32 %v366, %v43
    %s368 = scalar_lea.vmem [#allocation9], 32
    %369 = vst [vmem:[%s368] sm:$0xff] %v367
    %s370 = sadd.s32 %s44, 5
    %s371 = smul.u32 %s370, 8
    %s372 = sld [smem:[#allocation3 + %s371]]
    %s373 = scalar_lea.vmem [#allocation4], %s372
    %v374 = vld [vmem:[%s373] sm:$0x1]
    %s375 = sadd.s32 %s371, 1
    %s376 = sld [smem:[#allocation3 + %s375]]
    %s377 = scalar_lea.vmem [#allocation4], %s376
    %v378 = vld [vmem:[%s377] sm:$0x1]
    %s379 = sadd.s32 %s371, 2
    %s380 = sld [smem:[#allocation3 + %s379]]
    %s381 = scalar_lea.vmem [#allocation4], %s380
    %v382 = vld [vmem:[%s381] sm:$0x1]
    %s383 = sadd.s32 %s371, 3
    %s384 = sld [smem:[#allocation3 + %s383]]
    %s385 = scalar_lea.vmem [#allocation4], %s384
    %v386 = vld [vmem:[%s385] sm:$0x1]
    %s387 = sadd.s32 %s371, 4
    %s388 = sld [smem:[#allocation3 + %s387]]
    %s389 = scalar_lea.vmem [#allocation4], %s388
    %v390 = vld [vmem:[%s389] sm:$0x1]
    %s391 = sadd.s32 %s371, 5
    %s392 = sld [smem:[#allocation3 + %s391]]
    %s393 = scalar_lea.vmem [#allocation4], %s392
    %v394 = vld [vmem:[%s393] sm:$0x1]
    %s395 = sadd.s32 %s371, 6
    %s396 = sld [smem:[#allocation3 + %s395]]
    %s397 = scalar_lea.vmem [#allocation4], %s396
    %v398 = vld [vmem:[%s397] sm:$0x1]
    %s399 = sadd.s32 %s371, 7
    %s400 = sld [smem:[#allocation3 + %s399]]
    %s401 = scalar_lea.vmem [#allocation4], %s400
    %v402 = vld [vmem:[%s401] sm:$0x1]
    %v404 = vrot.slane %v378, 7
    %v407 = vrot.slane %v382, 6
    %v410 = vrot.slane %v386, 5
    %v413 = vrot.slane %v390, 4
    %v416 = vrot.slane %v394, 3
    %v419 = vrot.slane %v398, 2
    %v422 = vrot.slane %v402, 1
    %v424 = vsel %vm98, %v374, %v404
    %v425 = vsel %vm100, %v424, %v407
    %v426 = vsel %vm102, %v425, %v410
    %v427 = vsel %vm104, %v426, %v413
    %v428 = vsel %vm106, %v427, %v416
    %v429 = vsel %vm108, %v428, %v419
    %v430 = vsel %vm110, %v429, %v422
    %v431 = vadd.f32 %v430, %v43
    %s432 = scalar_lea.vmem [#allocation9], 40
    %433 = vst [vmem:[%s432] sm:$0xff] %v431
    %s434 = sadd.s32 %s44, 6
    %s435 = smul.u32 %s434, 8
    %s436 = sld [smem:[#allocation3 + %s435]]
    %s437 = scalar_lea.vmem [#allocation4], %s436
    %v438 = vld [vmem:[%s437] sm:$0x1]
    %s439 = sadd.s32 %s435, 1
    %s440 = sld [smem:[#allocation3 + %s439]]
    %s441 = scalar_lea.vmem [#allocation4], %s440
    %v442 = vld [vmem:[%s441] sm:$0x1]
    %s443 = sadd.s32 %s435, 2
    %s444 = sld [smem:[#allocation3 + %s443]]
    %s445 = scalar_lea.vmem [#allocation4], %s444
    %v446 = vld [vmem:[%s445] sm:$0x1]
    %s447 = sadd.s32 %s435, 3
    %s448 = sld [smem:[#allocation3 + %s447]]
    %s449 = scalar_lea.vmem [#allocation4], %s448
    %v450 = vld [vmem:[%s449] sm:$0x1]
    %s451 = sadd.s32 %s435, 4
    %s452 = sld [smem:[#allocation3 + %s451]]
    %s453 = scalar_lea.vmem [#allocation4], %s452
    %v454 = vld [vmem:[%s453] sm:$0x1]
    %s455 = sadd.s32 %s435, 5
    %s456 = sld [smem:[#allocation3 + %s455]]
    %s457 = scalar_lea.vmem [#allocation4], %s456
    %v458 = vld [vmem:[%s457] sm:$0x1]
    %s459 = sadd.s32 %s435, 6
    %s460 = sld [smem:[#allocation3 + %s459]]
    %s461 = scalar_lea.vmem [#allocation4], %s460
    %v462 = vld [vmem:[%s461] sm:$0x1]
    %s463 = sadd.s32 %s435, 7
    %s464 = sld [smem:[#allocation3 + %s463]]
    %s465 = scalar_lea.vmem [#allocation4], %s464
    %v466 = vld [vmem:[%s465] sm:$0x1]
    %v468 = vrot.slane %v442, 7
    %v471 = vrot.slane %v446, 6
    %v474 = vrot.slane %v450, 5
    %v477 = vrot.slane %v454, 4
    %v480 = vrot.slane %v458, 3
    %v483 = vrot.slane %v462, 2
    %v486 = vrot.slane %v466, 1
    %v488 = vsel %vm98, %v438, %v468
    %v489 = vsel %vm100, %v488, %v471
    %v490 = vsel %vm102, %v489, %v474
    %v491 = vsel %vm104, %v490, %v477
    %v492 = vsel %vm106, %v491, %v480
    %v493 = vsel %vm108, %v492, %v483
    %v494 = vsel %vm110, %v493, %v486
    %v495 = vadd.f32 %v494, %v43
    %s496 = scalar_lea.vmem [#allocation9], 48
    %497 = vst [vmem:[%s496] sm:$0xff] %v495
    %s498 = sadd.s32 %s44, 7
    %s499 = smul.u32 %s498, 8
    %s500 = sld [smem:[#allocation3 + %s499]]
    %s501 = scalar_lea.vmem [#allocation4], %s500
    %v502 = vld [vmem:[%s501] sm:$0x1]
    %s503 = sadd.s32 %s499, 1
    %s504 = sld [smem:[#allocation3 + %s503]]
    %s505 = scalar_lea.vmem [#allocation4], %s504
    %v506 = vld [vmem:[%s505] sm:$0x1]
    %s507 = sadd.s32 %s499, 2
    %s508 = sld [smem:[#allocation3 + %s507]]
    %s509 = scalar_lea.vmem [#allocation4], %s508
    %v510 = vld [vmem:[%s509] sm:$0x1]
    %s511 = sadd.s32 %s499, 3
    %s512 = sld [smem:[#allocation3 + %s511]]
    %s513 = scalar_lea.vmem [#allocation4], %s512
    %v514 = vld [vmem:[%s513] sm:$0x1]
    %s515 = sadd.s32 %s499, 4
    %s516 = sld [smem:[#allocation3 + %s515]]
    %s517 = scalar_lea.vmem [#allocation4], %s516
    %v518 = vld [vmem:[%s517] sm:$0x1]
    %s519 = sadd.s32 %s499, 5
    %s520 = sld [smem:[#allocation3 + %s519]]
    %s521 = scalar_lea.vmem [#allocation4], %s520
    %v522 = vld [vmem:[%s521] sm:$0x1]
    %s523 = sadd.s32 %s499, 6
    %s524 = sld [smem:[#allocation3 + %s523]]
    %s525 = scalar_lea.vmem [#allocation4], %s524
    %v526 = vld [vmem:[%s525] sm:$0x1]
    %s527 = sadd.s32 %s499, 7
    %s528 = sld [smem:[#allocation3 + %s527]]
    %s529 = scalar_lea.vmem [#allocation4], %s528
    %v530 = vld [vmem:[%s529] sm:$0x1]
    %v532 = vrot.slane %v506, 7
    %v535 = vrot.slane %v510, 6
    %v538 = vrot.slane %v514, 5
    %v541 = vrot.slane %v518, 4
    %v544 = vrot.slane %v522, 3
    %v547 = vrot.slane %v526, 2
    %v550 = vrot.slane %v530, 1
    %v552 = vsel %vm98, %v502, %v532
    %v553 = vsel %vm100, %v552, %v535
    %v554 = vsel %vm102, %v553, %v538
    %v555 = vsel %vm104, %v554, %v541
    %v556 = vsel %vm106, %v555, %v544
    %v557 = vsel %vm108, %v556, %v547
    %v558 = vsel %vm110, %v557, %v550
    %v559 = vadd.f32 %v558, %v43
    %s560 = scalar_lea.vmem [#allocation9], 56
    %561 = vst [vmem:[%s560] sm:$0xff] %v559
    // Predicated region
    $region18: #{tpu_custom_call.1} parent=1 // pred_check
      _
    $region19: #{tpu_custom_call.1} parent=1 // pred_check_branch
      %563 = sbr.rel (0) target = $region21
    $region20: #{tpu_custom_call.1} parent=1 // pred_region
      %s565 = ssub.s32 1024, 1024
      %566 = vsyncadd [#allocation6], %s565
      %s567 = sshll.u32 [#allocation9], 4
      %s568 = int_to_ptr.vmem [resolvable:$true] %s567
      %573 = dma.vmem_to_hbm [thread:$0]  %s568, 1024, %s3, [#allocation6], 128, 128, 8
    $region21: #{tpu_custom_call.1} parent=1 // pred_fallthru
      _
    // Predicated region
    $region22: #{tpu_custom_call.1} parent=1 // pred_check
      _
    $region23: #{tpu_custom_call.1} parent=1 // pred_check_branch
      %575 = sbr.rel (0) target = $region25
    $region24: #{tpu_custom_call.1} parent=1 // pred_region
      %576 = dma.done [#allocation6], 1024
    $region25: #{tpu_custom_call.1} parent=1 // pred_fallthru
      _
    %577 = vsyncpa [#allocation5], 1
    %578 = vsyncpa [#allocation8], 1
    %579 = vsyncpa [#allocation6], 1

</llo_original>
